<compile_context>
chip_gen: v6e
topology: v6e:2x2x1
jax: 0.10.0
libtpu: 0.0.40
codegen_flags: <defaults>
</compile_context>

<pallas_src>
import jax
import jax.numpy as jnp
from jax.experimental import pallas as pl
from jax.experimental.pallas import tpu as pltpu


def _round_up(n, m):
    return ((n + m - 1) // m) * m


# ---------------------------------------------------------------------------
# Hardware queries (best-effort, with safe fallbacks)
# ---------------------------------------------------------------------------
def _vmem_capacity_bytes():
    try:
        return int(pltpu.get_tpu_info().vmem_capacity_bytes)
    except Exception:
        return 128 << 20  # v5e / v6e default


def _mxu_width(default=256):
    try:
        info = pltpu.get_tpu_info()
        for name in ("mxu_column_size", "mxu_size", "mxu_width"):
            v = getattr(info, name, None)
            if v:
                return int(v)
    except Exception:
        pass
    return default


# ---------------------------------------------------------------------------
# Kernels
# ---------------------------------------------------------------------------
def _rfm_kernel_fused(x_ref, w1_ref, b1_ref, w2_ref, b2_ref,
                      id_ref, age_ref, gen_ref):
    """Layer 1 fused to (D, 2D); layer 2 fused as block-diagonal (2D, 2D).

    x_ref : (TB, D)  f32
    w1_ref: (D, 2D)  compute dtype   b1_ref: (1, 2D) compute dtype
    w2_ref: (2D, 2D) compute dtype   b2_ref: (1, 2D) f32
    """
    d = x_ref.shape[1]
    x = x_ref[...]                                        # (TB, D) f32
    cdt = w1_ref.dtype

    # Layer 1: MXU matmul, bias + ReLU kept in the compute dtype (bf16 path
    # avoids a (TB, 2D) f32 round-trip and the extra cast before layer 2).
    h = jnp.dot(x.astype(cdt), w1_ref[...], preferred_element_type=cdt)
    h = jnp.maximum(h + b1_ref[...], 0)                   # (TB, 2D) cdt

    # Layer 2 (block-diagonal): f32 accumulation + f32 bias.
    ag = jnp.dot(h, w2_ref[...], preferred_element_type=jnp.float32)
    ag = jnp.maximum(ag + b2_ref[...], 0.0)               # (TB, 2D) f32

    age = ag[:, :d]
    gen = ag[:, d:]
    id_ref[...] = (x - age - gen).astype(id_ref.dtype)
    age_ref[...] = age.astype(age_ref.dtype)
    gen_ref[...] = gen.astype(gen_ref.dtype)


def _rfm_kernel_split(x_ref, w1_ref, b1_ref, w2a_ref, b2a_ref, w2g_ref, b2g_ref,
                      id_ref, age_ref, gen_ref):
    """Layer 1 fused to (D, 2D); layer 2 kept as two (D, D) matmuls (large D
    or narrow-MXU chips where the block-diagonal trick wastes MXU passes)."""
    d = x_ref.shape[1]
    x = x_ref[...]                                        # (TB, D) f32
    cdt = w1_ref.dtype

    h = jnp.dot(x.astype(cdt), w1_ref[...], preferred_element_type=cdt)
    h = jnp.maximum(h + b1_ref[...], 0)                   # (TB, 2D) cdt

    age = jnp.dot(h[:, :d], w2a_ref[...], preferred_element_type=jnp.float32)
    age = jnp.maximum(age + b2a_ref[...], 0.0)

    gen = jnp.dot(h[:, d:], w2g_ref[...], preferred_element_type=jnp.float32)
    gen = jnp.maximum(gen + b2g_ref[...], 0.0)

    # Incremental residual keeps fewer (TB, D) f32 values live at once.
    tmp = x - age
    id_ref[...] = (tmp - gen).astype(id_ref.dtype)
    age_ref[...] = age.astype(age_ref.dtype)
    gen_ref[...] = gen.astype(gen_ref.dtype)


# ---------------------------------------------------------------------------
# One-time parameter preparation (transpose / concat / cast done ONCE)
# ---------------------------------------------------------------------------
def prepare_params(params, compute_dtype=jnp.bfloat16, fuse_layer2=None):
    """params: PyTorch-convention weights w* (out,in), b* (D,)."""
    D = params["w1a"].shape[0]
    if fuse_layer2 is None:
        # Block-diagonal layer 2 only pays off when 2D fits one MXU tile
        # (D <= 128 on v6e/v7x 256-wide MXU; never at D>=128 on v5e's 128).
        fuse_layer2 = (2 * D) <= _mxu_width()

    # Layer 1: y = x @ [w1a^T | w1g^T]  -> (D, 2D). Bias kept in compute dtype
    # so the layer-1 bias + ReLU stay off the f32 VPU path.
    w1 = jnp.concatenate([params["w1a"].T, params["w1g"].T],
                         axis=1).astype(compute_dtype)
    b1 = jnp.concatenate([params["b1a"], params["b1g"]]
                         ).reshape(1, 2 * D).astype(compute_dtype)
    prep = {"D": D, "fused": bool(fuse_layer2), "w1": w1, "b1": b1}

    if fuse_layer2:
        z = jnp.zeros((D, D), dtype=compute_dtype)
        top = jnp.concatenate([params["w2a"].T.astype(compute_dtype), z], axis=1)
        bot = jnp.concatenate([z, params["w2g"].T.astype(compute_dtype)], axis=1)
        prep["w2"] = jnp.concatenate([top, bot], axis=0)          # (2D, 2D)
        prep["b2"] = jnp.concatenate([params["b2a"], params["b2g"]]
                                     ).reshape(1, 2 * D).astype(jnp.float32)
    else:
        prep["w2a"] = params["w2a"].T.astype(compute_dtype)
        prep["b2a"] = params["b2a"].reshape(1, D).astype(jnp.float32)
        prep["w2g"] = params["w2g"].T.astype(compute_dtype)
        prep["b2g"] = params["b2g"].reshape(1, D).astype(jnp.float32)
    return prep


# ---------------------------------------------------------------------------
# Tile selection
# ---------------------------------------------------------------------------
def _tile_vmem_bytes(tb, D, w_bytes, cdt_size):
    io = 2 * 4 * tb * D * 4                     # x + 3 outs, double-buffered, f32
    inter = tb * 2 * D * (4 + cdt_size)         # layer-2 f32 acc + hidden in cdt
    inter += 2 * tb * D * 4                     # residual temporaries
    return io + inter + 2 * w_bytes + (2 << 20)


def _pick_tile(B, D, w_bytes, cdt_size, vmem_budget, block_b):
    if block_b is None:
        # 128-MiB-VMEM chips (v5e/v6e) can take bigger tiles than v7x (64 MiB).
        block_b = 8192 if vmem_budget > (80 << 20) else 4096
    tb = min(block_b, B)
    # Guarantee >= 2 grid steps when the batch allows it: lets v7x's two
    # TensorCores both work ("parallel" grid axis) and gives the auto
    # double-buffer pipeline something to overlap. Near-free on v5e/v6e.
    if B > 8:
        tb = min(tb, _round_up(pl.cdiv(B, 2), 8))
    # tb must be a multiple of 8 sublanes unless it covers the whole batch.
    if tb < B:
        tb = max(8, (tb // 8) * 8)
    # Shrink until the tile fits the per-generation VMEM budget.
    while tb > 8 and _tile_vmem_bytes(tb, D, w_bytes, cdt_size) > vmem_budget:
        tb = max(8, ((tb // 2) // 8) * 8)
    return tb


# ---------------------------------------------------------------------------
# Forward wrapper
# ---------------------------------------------------------------------------
def rfm_forward(x, prepared, *, block_b=None):
    """x: (B, D) f32. Returns (id_features, age_features, gender_features)."""
    B, D = x.shape
    assert D == prepared["D"]

    if prepared["fused"]:
        kernel = _rfm_kernel_fused
        weights = (prepared["w1"], prepared["b1"],
                   prepared["w2"], prepared["b2"])
        flops = 12 * B * D * D      # block-diag zeros are still MXU work
    else:
        kernel = _rfm_kernel_split
        weights = (prepared["w1"], prepared["b1"],
                   prepared["w2a"], prepared["b2a"],
                   prepared["w2g"], prepared["b2g"])
        flops = 8 * B * D * D

    w_bytes = sum(int(w.size) * w.dtype.itemsize for w in weights)
    cdt_size = jnp.dtype(prepared["w1"].dtype).itemsize

    # Per-generation VMEM budget: ~75% of physical VMEM (never the whole 64 MiB
    # on v7x; ~96 MiB on v5e/v6e).
    vmem_budget = int(0.75 * _vmem_capacity_bytes())

    tb = _pick_tile(B, D, w_bytes, cdt_size, vmem_budget, block_b)
    grid = (pl.cdiv(B, tb),)   # partial boundary block handled by Pallas:
                               # no jnp.pad input pass, no output-slice passes.

    row_spec = pl.BlockSpec((tb, D), lambda i: (i, 0))
    # Weights/biases are grid-invariant. When they are large (split path, big D)
    # single-buffer them so they don't eat 2x VMEM that a bigger batch tile
    # could use instead.
    single_buffer_weights = w_bytes > (4 << 20)
    weight_specs = []
    for w in weights:
        if single_buffer_weights:
            weight_specs.append(pl.BlockSpec(w.shape, lambda i: (0, 0),
                                             pipeline_mode=pl.Buffered(1)))
        else:
            weight_specs.append(pl.BlockSpec(w.shape, lambda i: (0, 0)))
    in_specs = [row_spec] + weight_specs

    out_spec = pl.BlockSpec((tb, D), lambda i: (i, 0))
    out_shape = tuple(jax.ShapeDtypeStruct((B, D), x.dtype) for _ in range(3))

    vmem_limit = int(min(max(_tile_vmem_bytes(tb, D, w_bytes, cdt_size),
                             16 << 20),
                         vmem_budget))

    cost = pl.CostEstimate(
        flops=flops,
        transcendentals=0,
        bytes_accessed=4 * B * D * x.dtype.itemsize + w_bytes,
    )

    outs = pl.pallas_call(
        kernel,
        out_shape=out_shape,
        grid_spec=pltpu.PrefetchScalarGridSpec(
            num_scalar_prefetch=0,
            grid=grid,
            in_specs=in_specs,
            out_specs=[out_spec, out_spec, out_spec],
        ),
        compiler_params=pltpu.CompilerParams(
            dimension_semantics=("parallel",),
            vmem_limit_bytes=vmem_limit,
        ),
        cost_estimate=cost,
    )(x, *weights)
    return outs


# ---------------------------------------------------------------------------
# Reference + init
# ---------------------------------------------------------------------------
def _init_params(key, D):
    """PyTorch nn.Linear-style init: U[-1/sqrt(D), 1/sqrt(D)]."""
    bound = 1.0 / (D ** 0.5)
    keys = jax.random.split(key, 8)
    names = ["w1a", "b1a", "w2a", "b2a", "w1g", "b1g", "w2g", "b2g"]
    params = {}
    for i, name in enumerate(names):
        shape = (D, D) if name.startswith("w") else (D,)
        params[name] = jax.random.uniform(
            keys[i], shape, dtype=jnp.float32, minval=-bound, maxval=bound)
    return params


def _rfm_reference(x, params, compute_dtype=jnp.float32):
    """Pure-JAX reference. With compute_dtype=f32 this is exactly the PyTorch
    semantics; with bf16 it mirrors the kernel's fast-path casting."""
    def branch(w1, b1, w2, b2):
        h = jnp.dot(x.astype(compute_dtype), w1.T.astype(compute_dtype),
                    preferred_element_type=compute_dtype)
        h = jnp.maximum(h + b1.astype(compute_dtype), 0)
        y = jnp.dot(h, w2.T.astype(compute_dtype),
                    preferred_element_type=jnp.float32)
        return jnp.maximum(y + b2.astype(jnp.float32), 0.0)

    age = branch(params["w1a"], params["b1a"], params["w2a"], params["b2a"])
    gen = branch(params["w1g"], params["b1g"], params["w2g"], params["b2g"])
    idf = x - age - gen
    return idf, age, gen


if __name__ == "__main__":
    key = jax.random.PRNGKey(0)
    B, D = 8, 128  # batch, input_dimension
    k_x, k_x2, k_p = jax.random.split(key, 3)
    x = jax.random.normal(k_x, (B, D), dtype=jnp.float32)
    params = _init_params(k_p, D)

    # 1) f32 compute, both layer-2 variants, vs the exact-PyTorch f32 reference.
    ref32 = _rfm_reference(x, params, compute_dtype=jnp.float32)
    for fuse in (True, False):
        prep = prepare_params(params, compute_dtype=jnp.float32,
                              fuse_layer2=fuse)
        out = rfm_forward(x, prep)
        jax.block_until_ready(out)
        for o, r in zip(out, ref32):
            assert o.shape == (B, D)
            assert jnp.allclose(o, r, atol=5e-3, rtol=5e-3)

    # 2) Default fast path: bf16 weights / f32 layer-2 accumulation, vs a
    #    reference mirroring the same casting.
    prep_bf16 = prepare_params(params)  # bf16 compute dtype, MXU-aware fusion
    out = rfm_forward(x, prep_bf16)
    jax.block_until_ready(out)
    ref_bf16 = _rfm_reference(x, params, compute_dtype=jnp.bfloat16)
    for o, r in zip(out, ref_bf16):
        assert jnp.allclose(o, r, atol=5e-3, rtol=5e-3)

    # 3) Non-divisible batch: multi-step grid with a partial boundary block
    #    (no jnp.pad, no output slicing).
    B2 = 12
    x2 = jax.random.normal(k_x2, (B2, D), dtype=jnp.float32)
    out2 = rfm_forward(x2, prep_bf16)          # grid of 2 steps (8 + partial 4)
    jax.block_until_ready(out2)
    ref2 = _rfm_reference(x2, params, compute_dtype=jnp.bfloat16)
    for o, r in zip(out2, ref2):
        assert o.shape == (B2, D)
        assert jnp.allclose(o, r, atol=5e-3, rtol=5e-3)

    # 4) Explicit small block override still works (forces several grid steps).
    out3 = rfm_forward(x2, prep_bf16, block_b=8)
    jax.block_until_ready(out3)
    for o, r in zip(out3, ref2):
        assert jnp.allclose(o, r, atol=5e-3, rtol=5e-3)

    print("KERNEL_OK")
</pallas_src>

<mosaic_0001>
module attributes {stable_mosaic.version = 11 : i64} {
  func.func @_rfm_kernel_fused(%arg0: i32, %arg1: memref<8x128xf32, #tpu.memory_space<vmem>>, %arg2: memref<128x256xf32, #tpu.memory_space<vmem>>, %arg3: memref<1x256xf32, #tpu.memory_space<vmem>>, %arg4: memref<256x256xf32, #tpu.memory_space<vmem>>, %arg5: memref<1x256xf32, #tpu.memory_space<vmem>>, %arg6: memref<8x128xf32, #tpu.memory_space<vmem>>, %arg7: memref<8x128xf32, #tpu.memory_space<vmem>>, %arg8: memref<8x128xf32, #tpu.memory_space<vmem>>) attributes {dimension_semantics = [#tpu.dimension_semantics<parallel>], iteration_bounds = array<i64: 1>, scalar_prefetch = 0 : i64, scratch_operands = 0 : i64, tpu.core_type = #tpu.core_type<tc>, window_params = [{transform_indices = @transform_0, window_bounds = array<i64: 8, 128>}, {pipeline_mode = #tpu.pipeline_mode<synchronous>, transform_indices = @transform_1, window_bounds = array<i64: 128, 256>}, {pipeline_mode = #tpu.pipeline_mode<synchronous>, transform_indices = @transform_2, window_bounds = array<i64: 1, 256>}, {pipeline_mode = #tpu.pipeline_mode<synchronous>, transform_indices = @transform_3, window_bounds = array<i64: 256, 256>}, {pipeline_mode = #tpu.pipeline_mode<synchronous>, transform_indices = @transform_4, window_bounds = array<i64: 1, 256>}, {transform_indices = @transform_5, window_bounds = array<i64: 8, 128>}, {transform_indices = @transform_6, window_bounds = array<i64: 8, 128>}, {transform_indices = @transform_7, window_bounds = array<i64: 8, 128>}]} {
    %c0 = arith.constant 0 : index
    %c0_0 = arith.constant 0 : index
    %0 = vector.load %arg1[%c0, %c0_0] : memref<8x128xf32, #tpu.memory_space<vmem>>, vector<8x128xf32>
    %c0_1 = arith.constant 0 : index
    %c0_2 = arith.constant 0 : index
    %1 = vector.load %arg2[%c0_1, %c0_2] : memref<128x256xf32, #tpu.memory_space<vmem>>, vector<128x256xf32>
    %cst = arith.constant dense<0.000000e+00> : vector<8x256xf32>
    %2 = tpu.matmul %0, %1, %cst {dimension_numbers = #tpu.dot_dimension_numbers<[1], [0], [0], [1], [0, 0, 1, 1], [], []>} : vector<8x128xf32>, vector<128x256xf32>, vector<8x256xf32> -> vector<8x256xf32>
    %c0_3 = arith.constant 0 : index
    %c0_4 = arith.constant 0 : index
    %3 = vector.load %arg3[%c0_3, %c0_4] : memref<1x256xf32, #tpu.memory_space<vmem>>, vector<1x256xf32>
    %4 = vector.broadcast %3 : vector<1x256xf32> to vector<8x256xf32>
    %5 = arith.addf %2, %4 : vector<8x256xf32>
    %cst_5 = arith.constant 0.000000e+00 : f32
    %6 = vector.broadcast %cst_5 : f32 to vector<8x256xf32>
    %7 = arith.maximumf %5, %6 : vector<8x256xf32>
    %c0_6 = arith.constant 0 : index
    %c0_7 = arith.constant 0 : index
    %8 = vector.load %arg4[%c0_6, %c0_7] : memref<256x256xf32, #tpu.memory_space<vmem>>, vector<256x256xf32>
    %cst_8 = arith.constant dense<0.000000e+00> : vector<8x256xf32>
    %9 = tpu.matmul %7, %8, %cst_8 {dimension_numbers = #tpu.dot_dimension_numbers<[1], [0], [0], [1], [0, 0, 1, 1], [], []>} : vector<8x256xf32>, vector<256x256xf32>, vector<8x256xf32> -> vector<8x256xf32>
    %c0_9 = arith.constant 0 : index
    %c0_10 = arith.constant 0 : index
    %10 = vector.load %arg5[%c0_9, %c0_10] : memref<1x256xf32, #tpu.memory_space<vmem>>, vector<1x256xf32>
    %11 = vector.broadcast %10 : vector<1x256xf32> to vector<8x256xf32>
    %12 = arith.addf %9, %11 : vector<8x256xf32>
    %cst_11 = arith.constant 0.000000e+00 : f32
    %13 = vector.broadcast %cst_11 : f32 to vector<8x256xf32>
    %14 = arith.maximumf %12, %13 : vector<8x256xf32>
    %15 = vector.extract_strided_slice %14 {offsets = [0, 0], sizes = [8, 128], strides = [1, 1]} : vector<8x256xf32> to vector<8x128xf32>
    %16 = vector.extract_strided_slice %14 {offsets = [0, 128], sizes = [8, 128], strides = [1, 1]} : vector<8x256xf32> to vector<8x128xf32>
    %17 = arith.subf %0, %15 : vector<8x128xf32>
    %18 = arith.subf %17, %16 : vector<8x128xf32>
    %c0_12 = arith.constant 0 : index
    %c0_13 = arith.constant 0 : index
    %19 = vector.load %arg6[%c0_12, %c0_13] : memref<8x128xf32, #tpu.memory_space<vmem>>, vector<8x128xf32>
    tpu.vector_store %arg6[%c0_12, %c0_13], %18 {strides = array<i32>} : memref<8x128xf32, #tpu.memory_space<vmem>>, vector<8x128xf32>,
    %c0_14 = arith.constant 0 : index
    %c0_15 = arith.constant 0 : index
    %20 = vector.load %arg7[%c0_14, %c0_15] : memref<8x128xf32, #tpu.memory_space<vmem>>, vector<8x128xf32>
    tpu.vector_store %arg7[%c0_14, %c0_15], %15 {strides = array<i32>} : memref<8x128xf32, #tpu.memory_space<vmem>>, vector<8x128xf32>,
    %c0_16 = arith.constant 0 : index
    %c0_17 = arith.constant 0 : index
    %21 = vector.load %arg8[%c0_16, %c0_17] : memref<8x128xf32, #tpu.memory_space<vmem>>, vector<8x128xf32>
    tpu.vector_store %arg8[%c0_16, %c0_17], %16 {strides = array<i32>} : memref<8x128xf32, #tpu.memory_space<vmem>>, vector<8x128xf32>,
    return
  }
  func.func @transform_0(%arg0: i32) -> (i32, i32) {
    %c0_i32 = arith.constant 0 : i32
    %c0_i32_0 = arith.constant 0 : i32
    return %arg0, %c0_i32 : i32, i32
  }
  func.func @transform_1(%arg0: i32) -> (i32, i32) {
    %c0_i32 = arith.constant 0 : i32
    %c0_i32_0 = arith.constant 0 : i32
    %c0_i32_1 = arith.constant 0 : i32
    return %c0_i32, %c0_i32_0 : i32, i32
  }
  func.func @transform_2(%arg0: i32) -> (i32, i32) {
    %c0_i32 = arith.constant 0 : i32
    %c0_i32_0 = arith.constant 0 : i32
    %c0_i32_1 = arith.constant 0 : i32
    return %c0_i32, %c0_i32_0 : i32, i32
  }
  func.func @transform_3(%arg0: i32) -> (i32, i32) {
    %c0_i32 = arith.constant 0 : i32
    %c0_i32_0 = arith.constant 0 : i32
    %c0_i32_1 = arith.constant 0 : i32
    return %c0_i32, %c0_i32_0 : i32, i32
  }
  func.func @transform_4(%arg0: i32) -> (i32, i32) {
    %c0_i32 = arith.constant 0 : i32
    %c0_i32_0 = arith.constant 0 : i32
    %c0_i32_1 = arith.constant 0 : i32
    return %c0_i32, %c0_i32_0 : i32, i32
  }
  func.func @transform_5(%arg0: i32) -> (i32, i32) {
    %c0_i32 = arith.constant 0 : i32
    %c0_i32_0 = arith.constant 0 : i32
    return %arg0, %c0_i32 : i32, i32
  }
  func.func @transform_6(%arg0: i32) -> (i32, i32) {
    %c0_i32 = arith.constant 0 : i32
    %c0_i32_0 = arith.constant 0 : i32
    return %arg0, %c0_i32 : i32, i32
  }
  func.func @transform_7(%arg0: i32) -> (i32, i32) {
    %c0_i32 = arith.constant 0 : i32
    %c0_i32_0 = arith.constant 0 : i32
    return %arg0, %c0_i32 : i32, i32
  }
}

</mosaic_0001>

<llo_original>
// kernel: tpu_custom_call.1
$region0: #{tpu_custom_call.1}
  #allocation0 [shape = 'u32[]', space=smem, size = 0x4, offset = 0x4, fixed_abs, tag = 'smem constant byte address 0x4 - core index']
  #allocation1 [shape = 'u32[144,128]{1,0:T(1,128)}', space=vmem, size = 0x12000, scoped, tag = 'internal scratch']
  %s0 = inlined_call_operand.hbm [shape: f32[8,128], index: 0, kind: input, shape index: {}]
  %s1 = inlined_call_operand.hbm [shape: f32[128,256], index: 1, kind: input, shape index: {}]
  %s2 = inlined_call_operand.vmem [shape: f32[1,256], index: 2, kind: input, shape index: {}]
  %s3 = inlined_call_operand.hbm [shape: f32[256,256], index: 3, kind: input, shape index: {}]
  %s4 = inlined_call_operand.vmem [shape: f32[1,256], index: 4, kind: input, shape index: {}]
  %s5 = inlined_call_operand.hbm [shape: f32[8,128], index: 5, kind: output, shape index: {0}]
  %s6 = inlined_call_operand.hbm [shape: f32[8,128], index: 6, kind: output, shape index: {1}]
  %s7 = inlined_call_operand.hbm [shape: f32[8,128], index: 7, kind: output, shape index: {2}]
  %8 = xla_tuple %s5, %s6, %s7
  %s9 = sld [smem:[#allocation0]]
  $region58: #{tpu_custom_call.1} parent=0
    _
  %s11 = ssub.s32 1, %s9
  %s12 = scalar_select 0, %s11, %s9
  $region1: #{tpu_custom_call.1} parent=0
    #allocation2 [shape = 'u8[4096]{0}', space=vmem, size = 0x1000, scoped, tag = 'input window, operand 0, single buffered']
    #allocation3 [shape = 's32[1]{0}', space=sflag, size = 0x4, scoped, tag = 'scoped memory for tpu_custom_call.1']
    #allocation4 [shape = 's32[1]{0}', space=sflag, size = 0x4, scoped, tag = 'scoped memory for tpu_custom_call.1']
    #allocation5 [shape = 'u8[131072]{0}', space=vmem, size = 0x20000, scoped, tag = 'input window, operand 1, single buffered']
    #allocation6 [shape = 's32[1]{0}', space=sflag, size = 0x4, scoped, tag = 'scoped memory for tpu_custom_call.1']
    #allocation7 [shape = 'u8[262144]{0}', space=vmem, size = 0x40000, scoped, tag = 'input window, operand 3, single buffered']
    #allocation8 [shape = 'u8[4096]{0}', space=vmem, size = 0x1000, scoped, tag = 'output window, operand 0, single buffered']
    #allocation9 [shape = 'u8[4096]{0}', space=vmem, size = 0x1000, scoped, tag = 'output window, operand 1, single buffered']
    #allocation10 [shape = 's32[1]{0}', space=sflag, size = 0x4, scoped, tag = 'scoped memory for tpu_custom_call.1']
    #allocation11 [shape = 'u8[4096]{0}', space=vmem, size = 0x1000, scoped, tag = 'output window, operand 2, single buffered']
    %13 = vsyncpa [#allocation3], 0
    %14 = vsyncpa [#allocation6], 0
    %15 = vsyncpa [#allocation4], 0
    %16 = vsyncpa [#allocation10], 0
    // Predicated region
    $region2: #{tpu_custom_call.1} parent=1 // pred_check
      _
    $region3: #{tpu_custom_call.1} parent=1 // pred_check_branch
      %18 = sbr.rel (0) target = $region5
    $region4: #{tpu_custom_call.1} parent=1 // pred_region
      %s20 = ssub.s32 128, 128
      %21 = vsyncadd [#allocation3], %s20
      %s23 = sshll.u32 [#allocation2], 4
      %s24 = int_to_ptr.vmem [resolvable:$true] %s23
      %26 = dma.hbm_to_vmem [thread:$0]  %s0, 128, %s24, [#allocation3]
    $region5: #{tpu_custom_call.1} parent=1 // pred_fallthru
      _
    // Predicated region
    $region6: #{tpu_custom_call.1} parent=1 // pred_check
      _
    $region7: #{tpu_custom_call.1} parent=1 // pred_check_branch
      %28 = sbr.rel (0) target = $region9
    $region8: #{tpu_custom_call.1} parent=1 // pred_region
      %s30 = ssub.s32 4096, 4096
      %31 = vsyncadd [#allocation6], %s30
      %s32 = sshll.u32 [#allocation5], 4
      %s33 = int_to_ptr.vmem [resolvable:$true] %s32
      %38 = dma.hbm_to_vmem [thread:$0]  %s1, 4096, %s33, [#allocation6], 256, 256, 16
    $region9: #{tpu_custom_call.1} parent=1 // pred_fallthru
      _
    // Predicated region
    $region10: #{tpu_custom_call.1} parent=1 // pred_check
      _
    $region11: #{tpu_custom_call.1} parent=1 // pred_check_branch
      %40 = sbr.rel (0) target = $region13
    $region12: #{tpu_custom_call.1} parent=1 // pred_region
      _
    $region13: #{tpu_custom_call.1} parent=1 // pred_fallthru
      _
    // Predicated region
    $region14: #{tpu_custom_call.1} parent=1 // pred_check
      _
    $region15: #{tpu_custom_call.1} parent=1 // pred_check_branch
      %42 = sbr.rel (0) target = $region17
    $region16: #{tpu_custom_call.1} parent=1 // pred_region
      %s44 = ssub.s32 8192, 8192
      %45 = vsyncadd [#allocation6], %s44
      %s46 = sshll.u32 [#allocation7], 4
      %s47 = int_to_ptr.vmem [resolvable:$true] %s46
      %52 = dma.hbm_to_vmem [thread:$0]  %s3, 8192, %s47, [#allocation6], 256, 256, 16
    $region17: #{tpu_custom_call.1} parent=1 // pred_fallthru
      _
    // Predicated region
    $region18: #{tpu_custom_call.1} parent=1 // pred_check
      _
    $region19: #{tpu_custom_call.1} parent=1 // pred_check_branch
      %54 = sbr.rel (0) target = $region21
    $region20: #{tpu_custom_call.1} parent=1 // pred_region
      _
    $region21: #{tpu_custom_call.1} parent=1 // pred_fallthru
      _
    // Predicated region
    $region22: #{tpu_custom_call.1} parent=1 // pred_check
      _
    $region23: #{tpu_custom_call.1} parent=1 // pred_check_branch
      %56 = sbr.rel (0) target = $region25
    $region24: #{tpu_custom_call.1} parent=1 // pred_region
      %57 = dma.done [#allocation3], 128
    $region25: #{tpu_custom_call.1} parent=1 // pred_fallthru
      _
    // Predicated region
    $region26: #{tpu_custom_call.1} parent=1 // pred_check
      _
    $region27: #{tpu_custom_call.1} parent=1 // pred_check_branch
      %59 = sbr.rel (0) target = $region29
    $region28: #{tpu_custom_call.1} parent=1 // pred_region
      %60 = dma.done [#allocation6], 4096
    $region29: #{tpu_custom_call.1} parent=1 // pred_fallthru
      _
    // Predicated region
    $region30: #{tpu_custom_call.1} parent=1 // pred_check
      _
    $region31: #{tpu_custom_call.1} parent=1 // pred_check_branch
      %62 = sbr.rel (0) target = $region33
    $region32: #{tpu_custom_call.1} parent=1 // pred_region
      %63 = dma.done [#allocation6], 8192
    $region33: #{tpu_custom_call.1} parent=1 // pred_fallthru
      _
    %v64 = vld [vmem:[#allocation2] sm:$0xff]
    %v65 = vld [vmem:[#allocation5] sm:$0xff]
    %v66 = vld [vmem:[#allocation5 + $0x8] sm:$0xff]
    %v67 = vld [vmem:[#allocation5 + $0x10] sm:$0xff]
    %v68 = vld [vmem:[#allocation5 + $0x18] sm:$0xff]
    %v69 = vld [vmem:[#allocation5 + $0x20] sm:$0xff]
    %v70 = vld [vmem:[#allocation5 + $0x28] sm:$0xff]
    %v71 = vld [vmem:[#allocation5 + $0x30] sm:$0xff]
    %v72 = vld [vmem:[#allocation5 + $0x38] sm:$0xff]
    %v73 = vld [vmem:[#allocation5 + $0x40] sm:$0xff]
    %v74 = vld [vmem:[#allocation5 + $0x48] sm:$0xff]
    %v75 = vld [vmem:[#allocation5 + $0x50] sm:$0xff]
    %v76 = vld [vmem:[#allocation5 + $0x58] sm:$0xff]
    %v77 = vld [vmem:[#allocation5 + $0x60] sm:$0xff]
    %v78 = vld [vmem:[#allocation5 + $0x68] sm:$0xff]
    %v79 = vld [vmem:[#allocation5 + $0x70] sm:$0xff]
    %v80 = vld [vmem:[#allocation5 + $0x78] sm:$0xff]
    %v81 = vld [vmem:[#allocation5 + $0x80] sm:$0xff]
    %v82 = vld [vmem:[#allocation5 + $0x88] sm:$0xff]
    %v83 = vld [vmem:[#allocation5 + $0x90] sm:$0xff]
    %v84 = vld [vmem:[#allocation5 + $0x98] sm:$0xff]
    %v85 = vld [vmem:[#allocation5 + $0xa0] sm:$0xff]
    %v86 = vld [vmem:[#allocation5 + $0xa8] sm:$0xff]
    %v87 = vld [vmem:[#allocation5 + $0xb0] sm:$0xff]
    %v88 = vld [vmem:[#allocation5 + $0xb8] sm:$0xff]
    %v89 = vld [vmem:[#allocation5 + $0xc0] sm:$0xff]
    %v90 = vld [vmem:[#allocation5 + $0xc8] sm:$0xff]
    %v91 = vld [vmem:[#allocation5 + $0xd0] sm:$0xff]
    %v92 = vld [vmem:[#allocation5 + $0xd8] sm:$0xff]
    %v93 = vld [vmem:[#allocation5 + $0xe0] sm:$0xff]
    %v94 = vld [vmem:[#allocation5 + $0xe8] sm:$0xff]
    %v95 = vld [vmem:[#allocation5 + $0xf0] sm:$0xff]
    %v96 = vld [vmem:[#allocation5 + $0xf8] sm:$0xff]
    %v97 = vld [vmem:[%s2] sm:$0x3]
    %v99 = vlaneseq
    %v100 = vshrl.u32 %v99, 7
    %v101 = vsub.s32 0, %v100
    %v102 = vrot.slane %v97, %v101
    %v103 = vlaneseq
    %v104 = vshrl.u32 %v103, 7
    %v105 = vsub.s32 1, %v104
    %v106 = vrot.slane %v97, %v105
    %109 = vmatprep.subr.mxu0 %v96
    %110 = vmatpush1.msra.mxu0 %v95
    %111 = vmatprep.subr.mxu0 %v94
    %112 = vmatpush1.msra.mxu0 %v93
    %113 = vmatprep.subr.mxu0 %v92
    %114 = vmatpush1.msra.mxu0 %v91
    %115 = vmatprep.subr.mxu0 %v90
    %116 = vmatpush1.msra.mxu0 %v89
    %117 = vmatprep.subr.mxu0 %v88
    %118 = vmatpush1.msra.mxu0 %v87
    %119 = vmatprep.subr.mxu0 %v86
    %120 = vmatpush1.msra.mxu0 %v85
    %121 = vmatprep.subr.mxu0 %v84
    %122 = vmatpush1.msra.mxu0 %v83
    %123 = vmatprep.subr.mxu0 %v82
    %124 = vmatpush1.msra.mxu0 %v81
    %125 = vmatprep.subr.mxu0 %v80
    %126 = vmatpush1.msra.mxu0 %v79
    %127 = vmatprep.subr.mxu0 %v78
    %128 = vmatpush1.msra.mxu0 %v77
    %129 = vmatprep.subr.mxu0 %v76
    %130 = vmatpush1.msra.mxu0 %v75
    %131 = vmatprep.subr.mxu0 %v74
    %132 = vmatpush1.msra.mxu0 %v73
    %133 = vmatprep.subr.mxu0 %v72
    %134 = vmatpush1.msra.mxu0 %v71
    %135 = vmatprep.subr.mxu0 %v70
    %136 = vmatpush1.msra.mxu0 %v69
    %137 = vmatprep.subr.mxu0 %v68
    %138 = vmatpush1.msra.mxu0 %v67
    %139 = vmatprep.subr.mxu0 %v66
    %140 = vmatpush1.msra.mxu0 %v65
    %141 = vmatprep.subr.mxu0 0.0
    %142 = vmatpush2.msra.mxu0 0.0
    %143 = vmatprep.subr.mxu0 0.0
    %144 = vmatpush2.msra.mxu0 0.0
    %145 = vmatprep.subr.mxu0 0.0
    %146 = vmatpush2.msra.mxu0 0.0
    %147 = vmatprep.subr.mxu0 0.0
    %148 = vmatpush2.msra.mxu0 0.0
    %149 = vmatprep.subr.mxu0 0.0
    %150 = vmatpush2.msra.mxu0 0.0
    %151 = vmatprep.subr.mxu0 0.0
    %152 = vmatpush2.msra.mxu0 0.0
    %153 = vmatprep.subr.mxu0 0.0
    %154 = vmatpush2.msra.mxu0 0.0
    %155 = vmatprep.subr.mxu0 0.0
    %156 = vmatpush2.msra.mxu0 0.0
    %157 = vmatprep.subr.mxu0 0.0
    %158 = vmatpush2.msra.mxu0 0.0
    %159 = vmatprep.subr.mxu0 0.0
    %160 = vmatpush2.msra.mxu0 0.0
    %161 = vmatprep.subr.mxu0 0.0
    %162 = vmatpush2.msra.mxu0 0.0
    %163 = vmatprep.subr.mxu0 0.0
    %164 = vmatpush2.msra.mxu0 0.0
    %165 = vmatprep.subr.mxu0 0.0
    %166 = vmatpush2.msra.mxu0 0.0
    %167 = vmatprep.subr.mxu0 0.0
    %168 = vmatpush2.msra.mxu0 0.0
    %169 = vmatprep.subr.mxu0 0.0
    %170 = vmatpush2.msra.mxu0 0.0
    %171 = vmatprep.subr.mxu0 0.0
    %172 = vmatpush2.msra.mxu0 0.0
    %173 = vmatprep.mubr.f32.mxu0 0.0
    %174 = vmatmul.mubr.f32.gmra.mxu0 %v64
    %v175 = vpop.f32.mrf.mxu0
    %v176 = vadd.f32 %v102, %v175
    %v177 = vpop.f32.mrf.mxu0
    %v178 = vadd.f32 %v106, %v177
    %179 = vdwg.mxu0
    %v180 = vmax.f32 %v176, 0.0
    %v181 = vmax.f32 %v178, 0.0
    %v182 = vld [vmem:[#allocation7] sm:$0xff]
    %v183 = vld [vmem:[#allocation7 + $0x8] sm:$0xff]
    %v184 = vld [vmem:[#allocation7 + $0x10] sm:$0xff]
    %v185 = vld [vmem:[#allocation7 + $0x18] sm:$0xff]
    %v186 = vld [vmem:[#allocation7 + $0x20] sm:$0xff]
    %v187 = vld [vmem:[#allocation7 + $0x28] sm:$0xff]
    %v188 = vld [vmem:[#allocation7 + $0x30] sm:$0xff]
    %v189 = vld [vmem:[#allocation7 + $0x38] sm:$0xff]
    %v190 = vld [vmem:[#allocation7 + $0x40] sm:$0xff]
    %v191 = vld [vmem:[#allocation7 + $0x48] sm:$0xff]
    %v192 = vld [vmem:[#allocation7 + $0x50] sm:$0xff]
    %v193 = vld [vmem:[#allocation7 + $0x58] sm:$0xff]
    %v194 = vld [vmem:[#allocation7 + $0x60] sm:$0xff]
    %v195 = vld [vmem:[#allocation7 + $0x68] sm:$0xff]
    %v196 = vld [vmem:[#allocation7 + $0x70] sm:$0xff]
    %v197 = vld [vmem:[#allocation7 + $0x78] sm:$0xff]
    %v198 = vld [vmem:[#allocation7 + $0x80] sm:$0xff]
    %v199 = vld [vmem:[#allocation7 + $0x88] sm:$0xff]
    %v200 = vld [vmem:[#allocation7 + $0x90] sm:$0xff]
    %v201 = vld [vmem:[#allocation7 + $0x98] sm:$0xff]
    %v202 = vld [vmem:[#allocation7 + $0xa0] sm:$0xff]
    %v203 = vld [vmem:[#allocation7 + $0xa8] sm:$0xff]
    %v204 = vld [vmem:[#allocation7 + $0xb0] sm:$0xff]
    %v205 = vld [vmem:[#allocation7 + $0xb8] sm:$0xff]
    %v206 = vld [vmem:[#allocation7 + $0xc0] sm:$0xff]
    %v207 = vld [vmem:[#allocation7 + $0xc8] sm:$0xff]
    %v208 = vld [vmem:[#allocation7 + $0xd0] sm:$0xff]
    %v209 = vld [vmem:[#allocation7 + $0xd8] sm:$0xff]
    %v210 = vld [vmem:[#allocation7 + $0xe0] sm:$0xff]
    %v211 = vld [vmem:[#allocation7 + $0xe8] sm:$0xff]
    %v212 = vld [vmem:[#allocation7 + $0xf0] sm:$0xff]
    %v213 = vld [vmem:[#allocation7 + $0xf8] sm:$0xff]
    %v214 = vld [vmem:[#allocation7 + $0x100] sm:$0xff]
    %v215 = vld [vmem:[#allocation7 + $0x108] sm:$0xff]
    %v216 = vld [vmem:[#allocation7 + $0x110] sm:$0xff]
    %v217 = vld [vmem:[#allocation7 + $0x118] sm:$0xff]
    %v218 = vld [vmem:[#allocation7 + $0x120] sm:$0xff]
    %v219 = vld [vmem:[#allocation7 + $0x128] sm:$0xff]
    %v220 = vld [vmem:[#allocation7 + $0x130] sm:$0xff]
    %v221 = vld [vmem:[#allocation7 + $0x138] sm:$0xff]
    %v222 = vld [vmem:[#allocation7 + $0x140] sm:$0xff]
    %v223 = vld [vmem:[#allocation7 + $0x148] sm:$0xff]
    %v224 = vld [vmem:[#allocation7 + $0x150] sm:$0xff]
    %v225 = vld [vmem:[#allocation7 + $0x158] sm:$0xff]
    %v226 = vld [vmem:[#allocation7 + $0x160] sm:$0xff]
    %v227 = vld [vmem:[#allocation7 + $0x168] sm:$0xff]
    %v228 = vld [vmem:[#allocation7 + $0x170] sm:$0xff]
    %v229 = vld [vmem:[#allocation7 + $0x178] sm:$0xff]
    %v230 = vld [vmem:[#allocation7 + $0x180] sm:$0xff]
    %v231 = vld [vmem:[#allocation7 + $0x188] sm:$0xff]
    %v232 = vld [vmem:[#allocation7 + $0x190] sm:$0xff]
    %v233 = vld [vmem:[#allocation7 + $0x198] sm:$0xff]
    %v234 = vld [vmem:[#allocation7 + $0x1a0] sm:$0xff]
    %v235 = vld [vmem:[#allocation7 + $0x1a8] sm:$0xff]
    %v236 = vld [vmem:[#allocation7 + $0x1b0] sm:$0xff]
    %v237 = vld [vmem:[#allocation7 + $0x1b8] sm:$0xff]
    %v238 = vld [vmem:[#allocation7 + $0x1c0] sm:$0xff]
    %v239 = vld [vmem:[#allocation7 + $0x1c8] sm:$0xff]
    %v240 = vld [vmem:[#allocation7 + $0x1d0] sm:$0xff]
    %v241 = vld [vmem:[#allocation7 + $0x1d8] sm:$0xff]
    %v242 = vld [vmem:[#allocation7 + $0x1e0] sm:$0xff]
    %v243 = vld [vmem:[#allocation7 + $0x1e8] sm:$0xff]
    %v244 = vld [vmem:[#allocation7 + $0x1f0] sm:$0xff]
    %v245 = vld [vmem:[#allocation7 + $0x1f8] sm:$0xff]
    %v246 = vld [vmem:[%s4] sm:$0x3]
    %v248 = vlaneseq
    %v249 = vshrl.u32 %v248, 7
    %v250 = vsub.s32 0, %v249
    %v251 = vrot.slane %v246, %v250
    %v252 = vlaneseq
    %v253 = vshrl.u32 %v252, 7
    %v254 = vsub.s32 1, %v253
    %v255 = vrot.slane %v246, %v254
    %258 = vmatprep.subr.mxu0 %v213
    %259 = vmatpush1.msra.mxu0 %v212
    %260 = vmatprep.subr.mxu0 %v211
    %261 = vmatpush1.msra.mxu0 %v210
    %262 = vmatprep.subr.mxu0 %v209
    %263 = vmatpush1.msra.mxu0 %v208
    %264 = vmatprep.subr.mxu0 %v207
    %265 = vmatpush1.msra.mxu0 %v206
    %266 = vmatprep.subr.mxu0 %v205
    %267 = vmatpush1.msra.mxu0 %v204
    %268 = vmatprep.subr.mxu0 %v203
    %269 = vmatpush1.msra.mxu0 %v202
    %270 = vmatprep.subr.mxu0 %v201
    %271 = vmatpush1.msra.mxu0 %v200
    %272 = vmatprep.subr.mxu0 %v199
    %273 = vmatpush1.msra.mxu0 %v198
    %274 = vmatprep.subr.mxu0 %v197
    %275 = vmatpush1.msra.mxu0 %v196
    %276 = vmatprep.subr.mxu0 %v195
    %277 = vmatpush1.msra.mxu0 %v194
    %278 = vmatprep.subr.mxu0 %v193
    %279 = vmatpush1.msra.mxu0 %v192
    %280 = vmatprep.subr.mxu0 %v191
    %281 = vmatpush1.msra.mxu0 %v190
    %282 = vmatprep.subr.mxu0 %v189
    %283 = vmatpush1.msra.mxu0 %v188
    %284 = vmatprep.subr.mxu0 %v187
    %285 = vmatpush1.msra.mxu0 %v186
    %286 = vmatprep.subr.mxu0 %v185
    %287 = vmatpush1.msra.mxu0 %v184
    %288 = vmatprep.subr.mxu0 %v183
    %289 = vmatpush1.msra.mxu0 %v182
    %290 = vmatprep.subr.mxu0 %v245
    %291 = vmatpush2.msra.mxu0 %v244
    %292 = vmatprep.subr.mxu0 %v243
    %293 = vmatpush2.msra.mxu0 %v242
    %294 = vmatprep.subr.mxu0 %v241
    %295 = vmatpush2.msra.mxu0 %v240
    %296 = vmatprep.subr.mxu0 %v239
    %297 = vmatpush2.msra.mxu0 %v238
    %298 = vmatprep.subr.mxu0 %v237
    %299 = vmatpush2.msra.mxu0 %v236
    %300 = vmatprep.subr.mxu0 %v235
    %301 = vmatpush2.msra.mxu0 %v234
    %302 = vmatprep.subr.mxu0 %v233
    %303 = vmatpush2.msra.mxu0 %v232
    %304 = vmatprep.subr.mxu0 %v231
    %305 = vmatpush2.msra.mxu0 %v230
    %306 = vmatprep.subr.mxu0 %v229
    %307 = vmatpush2.msra.mxu0 %v228
    %308 = vmatprep.subr.mxu0 %v227
    %309 = vmatpush2.msra.mxu0 %v226
    %310 = vmatprep.subr.mxu0 %v225
    %311 = vmatpush2.msra.mxu0 %v224
    %312 = vmatprep.subr.mxu0 %v223
    %313 = vmatpush2.msra.mxu0 %v222
    %314 = vmatprep.subr.mxu0 %v221
    %315 = vmatpush2.msra.mxu0 %v220
    %316 = vmatprep.subr.mxu0 %v219
    %317 = vmatpush2.msra.mxu0 %v218
    %318 = vmatprep.subr.mxu0 %v217
    %319 = vmatpush2.msra.mxu0 %v216
    %320 = vmatprep.subr.mxu0 %v215
    %321 = vmatpush2.msra.mxu0 %v214
    %322 = vmatprep.mubr.f32.mxu0 %v181
    %323 = vmatmul.mubr.f32.gmra.mxu0 %v180
    %v324 = vpop.f32.mrf.mxu0
    %v325 = vadd.f32 %v251, %v324
    %v326 = vpop.f32.mrf.mxu0
    %v327 = vadd.f32 %v255, %v326
    %328 = vdwg.mxu0
    %v329 = vmax.f32 %v325, 0.0
    %v330 = vmax.f32 %v327, 0.0
    %v331 = vsub.f32 %v64, %v329
    %v332 = vsub.f32 %v331, %v330
    %333 = vst [vmem:[#allocation8] sm:$0xff] %v332
    %334 = vst [vmem:[#allocation9] sm:$0xff] %v329
    %335 = vst [vmem:[#allocation11] sm:$0xff] %v330
    // Predicated region
    $region34: #{tpu_custom_call.1} parent=1 // pred_check
      _
    $region35: #{tpu_custom_call.1} parent=1 // pred_check_branch
      %337 = sbr.rel (0) target = $region37
    $region36: #{tpu_custom_call.1} parent=1 // pred_region
      %s339 = ssub.s32 128, 128
      %340 = vsyncadd [#allocation4], %s339
      %s342 = sshll.u32 [#allocation8], 4
      %s343 = int_to_ptr.vmem [resolvable:$true] %s342
      %345 = dma.vmem_to_hbm [thread:$0]  %s343, 128, %s5, [#allocation4]
    $region37: #{tpu_custom_call.1} parent=1 // pred_fallthru
      _
    // Predicated region
    $region38: #{tpu_custom_call.1} parent=1 // pred_check
      _
    $region39: #{tpu_custom_call.1} parent=1 // pred_check_branch
      %347 = sbr.rel (0) target = $region41
    $region40: #{tpu_custom_call.1} parent=1 // pred_region
      %s349 = ssub.s32 128, 128
      %350 = vsyncadd [#allocation10], %s349
      %s352 = sshll.u32 [#allocation9], 4
      %s353 = int_to_ptr.vmem [resolvable:$true] %s352
      %355 = dma.vmem_to_hbm [thread:$0]  %s353, 128, %s6, [#allocation10]
    $region41: #{tpu_custom_call.1} parent=1 // pred_fallthru
      _
    // Predicated region
    $region42: #{tpu_custom_call.1} parent=1 // pred_check
      _
    $region43: #{tpu_custom_call.1} parent=1 // pred_check_branch
      %357 = sbr.rel (0) target = $region45
    $region44: #{tpu_custom_call.1} parent=1 // pred_region
      %s359 = ssub.s32 128, 128
      %360 = vsyncadd [#allocation10], %s359
      %s362 = sshll.u32 [#allocation11], 4
      %s363 = int_to_ptr.vmem [resolvable:$true] %s362
      %365 = dma.vmem_to_hbm [thread:$0]  %s363, 128, %s7, [#allocation10]
    $region45: #{tpu_custom_call.1} parent=1 // pred_fallthru
      _
    // Predicated region
    $region46: #{tpu_custom_call.1} parent=1 // pred_check
      _
    $region47: #{tpu_custom_call.1} parent=1 // pred_check_branch
      %367 = sbr.rel (0) target = $region49
    $region48: #{tpu_custom_call.1} parent=1 // pred_region
      %368 = dma.done [#allocation4], 128
    $region49: #{tpu_custom_call.1} parent=1 // pred_fallthru
      _
    // Predicated region
    $region50: #{tpu_custom_call.1} parent=1 // pred_check
      _
    $region51: #{tpu_custom_call.1} parent=1 // pred_check_branch
      %370 = sbr.rel (0) target = $region53
    $region52: #{tpu_custom_call.1} parent=1 // pred_region
      %371 = dma.done [#allocation10], 128
    $region53: #{tpu_custom_call.1} parent=1 // pred_fallthru
      _
    // Predicated region
    $region54: #{tpu_custom_call.1} parent=1 // pred_check
      _
    $region55: #{tpu_custom_call.1} parent=1 // pred_check_branch
      %373 = sbr.rel (0) target = $region57
    $region56: #{tpu_custom_call.1} parent=1 // pred_region
      %374 = dma.done [#allocation10], 128
    $region57: #{tpu_custom_call.1} parent=1 // pred_fallthru
      _
    %375 = vsyncpa [#allocation3], 1
    %376 = vsyncpa [#allocation6], 1
    %377 = vsyncpa [#allocation4], 1
    %378 = vsyncpa [#allocation10], 1

</llo_original>
